<compile_context>
chip_gen: v7x
topology: tpu7x:2x2x1
jax: 0.10.0
libtpu: 0.0.40
codegen_flags: <defaults>
</compile_context>

<pallas_src>
import functools

import jax
import jax.numpy as jnp
from jax.experimental import pallas as pl
from jax.experimental.pallas import tpu as pltpu


def _graphs_kernel(x_ref, m_ref, simi_ref, dist_ref, *, C, L, heads):
    # x_ref:    (1, C, L)           one batch's node features
    # m_ref:    (L, 2*heads*L)      packed M[g] = +/- Wq[g] @ Wk[g]^T / sqrt(H)
    # simi_ref: (1, heads, C, C)
    # dist_ref: (1, heads, C, C)
    G = 2 * heads
    xb = x_ref[0]                                     # (C, L)
    m = m_ref[...]                                    # (L, G*L)

    # Stage 1: one lane-dense MXU matmul -> q[g] = x_b @ M[g], all graphs at once.
    proj = jnp.dot(xb, m, preferred_element_type=jnp.float32)   # (C, G*L) = (8, 128)

    # Stage 2: per graph, contract against x_b^T (no materialized transpose),
    # apply sigmoid and store the (C, C) block directly into the output layout.
    for g in range(G):
        qg = proj[:, g * L:(g + 1) * L]               # (C, L)
        s = jax.lax.dot_general(
            qg, xb, (((1,), (1,)), ((), ())),
            preferred_element_type=jnp.float32)       # (C, C) = x_b M[g] x_b^T
        graph = jax.nn.sigmoid(s)                     # scale & dist-negation folded in M
        if g < heads:
            simi_ref[0, g, :, :] = graph
        else:
            dist_ref[0, g - heads, :, :] = graph


def feature_graphs_pallas(x, m_flat):
    """x: (B, C, L) f32; m_flat: (L, 2*heads*L) packed weights. -> (simi, dist)."""
    B, C, L = x.shape
    GL = m_flat.shape[1]
    G = GL // L
    heads = G // 2

    kernel = functools.partial(_graphs_kernel, C=C, L=L, heads=heads)
    flops = B * (2 * C * L * GL + G * 2 * C * L * C)
    transcendentals = B * G * C * C
    bytes_accessed = 4 * (B * C * L + L * GL + 2 * B * heads * C * C)

    simi, dist = pl.pallas_call(
        kernel,
        out_shape=(jax.ShapeDtypeStruct((B, heads, C, C), jnp.float32),
                   jax.ShapeDtypeStruct((B, heads, C, C), jnp.float32)),
        grid=(B,),
        in_specs=[
            pl.BlockSpec((1, C, L), lambda b: (b, 0, 0)),
            pl.BlockSpec((L, GL), lambda b: (0, 0)),
        ],
        out_specs=(
            pl.BlockSpec((1, heads, C, C), lambda b: (b, 0, 0, 0)),
            pl.BlockSpec((1, heads, C, C), lambda b: (b, 0, 0, 0)),
        ),
        compiler_params=pltpu.CompilerParams(
            dimension_semantics=("parallel",)),
        cost_estimate=pl.CostEstimate(flops=flops,
                                      transcendentals=transcendentals,
                                      bytes_accessed=bytes_accessed),
    )(x, m_flat)
    return simi, dist


def pack_graph_weights(wq_s, wk_s, wq_d, wk_d):
    """Init-time weight fold: M_s = Wq_s Wk_s^T / sqrt(H), M_d = -Wq_d Wk_d^T / sqrt(H),
    packed as (L, 2*heads*L) with m_flat[l, g*L + m] = M[g][l, m]."""
    heads, L, H = wq_s.shape
    scale = 1.0 / jnp.sqrt(jnp.float32(H))
    m_s = jnp.einsum("hld,hmd->hlm", wq_s, wk_s) * scale        # (heads, L, L)
    m_d = jnp.einsum("hld,hmd->hlm", wq_d, wk_d) * (-scale)     # dist = sigmoid(-s)
    m_all = jnp.concatenate([m_s, m_d], axis=0)                  # (2*heads, L, L)
    m_flat = jnp.transpose(m_all, (1, 0, 2)).reshape(L, 2 * heads * L)
    return m_flat


def make_feature_graphs_generator(wq_s, wk_s, wq_d, wk_d):
    """Mirrors the nn.Module init/forward split: weight prep runs once here, the
    per-call path is a single pallas_call."""
    m_flat = pack_graph_weights(wq_s, wk_s, wq_d, wk_d)
    m_flat = jax.device_put(m_flat)

    forward_jit = jax.jit(lambda x: feature_graphs_pallas(x, m_flat))

    def forward(x):
        simi, dist = forward_jit(x)
        feat_cl_loss = 0.0            # configs['feat_cl_loss'] == False
        return simi, dist, feat_cl_loss

    return forward


if __name__ == "__main__":
    # configs: n_feat(heads)=4, seq_len=16, n_channels=8, attn_hid_dim=32
    B, C, L, H, heads = 2, 8, 16, 32, 4

    key = jax.random.PRNGKey(0)
    kx, kqs, kks, kqd, kkd = jax.random.split(key, 5)
    x = jax.random.normal(kx, (B, C, L), dtype=jnp.float32)
    wq_s = jax.random.normal(kqs, (heads, L, H), dtype=jnp.float32) * 0.1
    wk_s = jax.random.normal(kks, (heads, L, H), dtype=jnp.float32) * 0.1
    wq_d = jax.random.normal(kqd, (heads, L, H), dtype=jnp.float32) * 0.1
    wk_d = jax.random.normal(kkd, (heads, L, H), dtype=jnp.float32) * 0.1

    gen = make_feature_graphs_generator(wq_s, wk_s, wq_d, wk_d)
    simi, dist, cl_loss = gen(x)
    jax.block_until_ready((simi, dist))

    # sanity check against plain-JAX reference (original, unfolded math)
    def ref_attn(xv, wq, wk):
        q = jnp.einsum("bcl,hld->bhcd", xv, wq)
        k = jnp.einsum("bcl,hld->bhcd", xv, wk)
        return jax.nn.sigmoid(
            jnp.einsum("bhcd,bhed->bhce", q, k) / jnp.sqrt(jnp.float32(H)))

    simi_ref = ref_attn(x, wq_s, wk_s)
    dist_ref = 1.0 - ref_attn(x, wq_d, wk_d)
    assert simi.shape == (B, heads, C, C) and dist.shape == (B, heads, C, C)
    assert jnp.allclose(simi, simi_ref, atol=1e-5)
    assert jnp.allclose(dist, dist_ref, atol=1e-5)
    assert cl_loss == 0.0

    print("KERNEL_OK")
</pallas_src>

<mosaic_0001>
module attributes {stable_mosaic.version = 11 : i64} {
  func.func @_graphs_kernel(%arg0: i32, %arg1: memref<1x8x16xf32, #tpu.memory_space<vmem>>, %arg2: memref<16x128xf32, #tpu.memory_space<vmem>>, %arg3: memref<1x4x8x8xf32, #tpu.memory_space<vmem>>, %arg4: memref<1x4x8x8xf32, #tpu.memory_space<vmem>>) attributes {dimension_semantics = [#tpu.dimension_semantics<parallel>], iteration_bounds = array<i64: 2>, scalar_prefetch = 0 : i64, scratch_operands = 0 : i64, tpu.core_type = #tpu.core_type<tc>, window_params = [{transform_indices = @transform_0, window_bounds = array<i64: 1, 8, 16>}, {pipeline_mode = #tpu.pipeline_mode<synchronous>, transform_indices = @transform_1, window_bounds = array<i64: 16, 128>}, {transform_indices = @transform_2, window_bounds = array<i64: 1, 4, 8, 8>}, {transform_indices = @transform_3, window_bounds = array<i64: 1, 4, 8, 8>}]} {
    %c0 = arith.constant 0 : index
    %c0_0 = arith.constant 0 : index
    %c0_1 = arith.constant 0 : index
    %0 = vector.load %arg1[%c0, %c0_0, %c0_1] : memref<1x8x16xf32, #tpu.memory_space<vmem>>, vector<1x8x16xf32>
    %1 = vector.shape_cast %0 : vector<1x8x16xf32> to vector<8x16xf32>
    %c0_2 = arith.constant 0 : index
    %c0_3 = arith.constant 0 : index
    %2 = vector.load %arg2[%c0_2, %c0_3] : memref<16x128xf32, #tpu.memory_space<vmem>>, vector<16x128xf32>
    %cst = arith.constant dense<0.000000e+00> : vector<8x128xf32>
    %3 = tpu.matmul %1, %2, %cst {dimension_numbers = #tpu.dot_dimension_numbers<[1], [0], [0], [1], [0, 0, 1, 1], [], []>} : vector<8x16xf32>, vector<16x128xf32>, vector<8x128xf32> -> vector<8x128xf32>
    %4 = vector.extract_strided_slice %3 {offsets = [0, 0], sizes = [8, 16], strides = [1, 1]} : vector<8x128xf32> to vector<8x16xf32>
    %cst_4 = arith.constant dense<0.000000e+00> : vector<8x8xf32>
    %5 = tpu.matmul %4, %1, %cst_4 {dimension_numbers = #tpu.dot_dimension_numbers<[1], [1], [0], [0], [0, 0, 1, 0], [], []>} : vector<8x16xf32>, vector<8x16xf32>, vector<8x8xf32> -> vector<8x8xf32>
    %6 = arith.negf %5 : vector<8x8xf32>
    %7 = math.exp %6 : vector<8x8xf32>
    %cst_5 = arith.constant 1.000000e+00 : f32
    %8 = vector.broadcast %cst_5 : f32 to vector<8x8xf32>
    %9 = arith.addf %8, %7 : vector<8x8xf32>
    %10 = arith.divf %8, %9 : vector<8x8xf32>
    %c0_6 = arith.constant 0 : index
    %c0_7 = arith.constant 0 : index
    %c0_8 = arith.constant 0 : index
    %c0_9 = arith.constant 0 : index
    %11 = vector.load %arg3[%c0_6, %c0_7, %c0_8, %c0_9] : memref<1x4x8x8xf32, #tpu.memory_space<vmem>>, vector<1x1x8x8xf32>
    %12 = vector.shape_cast %11 : vector<1x1x8x8xf32> to vector<8x8xf32>
    %13 = vector.shape_cast %10 : vector<8x8xf32> to vector<1x1x8x8xf32>
    tpu.vector_store %arg3[%c0_6, %c0_7, %c0_8, %c0_9], %13 {strides = array<i32>} : memref<1x4x8x8xf32, #tpu.memory_space<vmem>>, vector<1x1x8x8xf32>,
    %14 = vector.extract_strided_slice %3 {offsets = [0, 16], sizes = [8, 16], strides = [1, 1]} : vector<8x128xf32> to vector<8x16xf32>
    %cst_10 = arith.constant dense<0.000000e+00> : vector<8x8xf32>
    %15 = tpu.matmul %14, %1, %cst_10 {dimension_numbers = #tpu.dot_dimension_numbers<[1], [1], [0], [0], [0, 0, 1, 0], [], []>} : vector<8x16xf32>, vector<8x16xf32>, vector<8x8xf32> -> vector<8x8xf32>
    %16 = arith.negf %15 : vector<8x8xf32>
    %17 = math.exp %16 : vector<8x8xf32>
    %cst_11 = arith.constant 1.000000e+00 : f32
    %18 = vector.broadcast %cst_11 : f32 to vector<8x8xf32>
    %19 = arith.addf %18, %17 : vector<8x8xf32>
    %20 = arith.divf %18, %19 : vector<8x8xf32>
    %c0_12 = arith.constant 0 : index
    %c1 = arith.constant 1 : index
    %c0_13 = arith.constant 0 : index
    %c0_14 = arith.constant 0 : index
    %21 = vector.load %arg3[%c0_12, %c1, %c0_13, %c0_14] : memref<1x4x8x8xf32, #tpu.memory_space<vmem>>, vector<1x1x8x8xf32>
    %22 = vector.shape_cast %21 : vector<1x1x8x8xf32> to vector<8x8xf32>
    %23 = vector.shape_cast %20 : vector<8x8xf32> to vector<1x1x8x8xf32>
    tpu.vector_store %arg3[%c0_12, %c1, %c0_13, %c0_14], %23 {strides = array<i32>} : memref<1x4x8x8xf32, #tpu.memory_space<vmem>>, vector<1x1x8x8xf32>,
    %24 = vector.extract_strided_slice %3 {offsets = [0, 32], sizes = [8, 16], strides = [1, 1]} : vector<8x128xf32> to vector<8x16xf32>
    %cst_15 = arith.constant dense<0.000000e+00> : vector<8x8xf32>
    %25 = tpu.matmul %24, %1, %cst_15 {dimension_numbers = #tpu.dot_dimension_numbers<[1], [1], [0], [0], [0, 0, 1, 0], [], []>} : vector<8x16xf32>, vector<8x16xf32>, vector<8x8xf32> -> vector<8x8xf32>
    %26 = arith.negf %25 : vector<8x8xf32>
    %27 = math.exp %26 : vector<8x8xf32>
    %cst_16 = arith.constant 1.000000e+00 : f32
    %28 = vector.broadcast %cst_16 : f32 to vector<8x8xf32>
    %29 = arith.addf %28, %27 : vector<8x8xf32>
    %30 = arith.divf %28, %29 : vector<8x8xf32>
    %c0_17 = arith.constant 0 : index
    %c2 = arith.constant 2 : index
    %c0_18 = arith.constant 0 : index
    %c0_19 = arith.constant 0 : index
    %31 = vector.load %arg3[%c0_17, %c2, %c0_18, %c0_19] : memref<1x4x8x8xf32, #tpu.memory_space<vmem>>, vector<1x1x8x8xf32>
    %32 = vector.shape_cast %31 : vector<1x1x8x8xf32> to vector<8x8xf32>
    %33 = vector.shape_cast %30 : vector<8x8xf32> to vector<1x1x8x8xf32>
    tpu.vector_store %arg3[%c0_17, %c2, %c0_18, %c0_19], %33 {strides = array<i32>} : memref<1x4x8x8xf32, #tpu.memory_space<vmem>>, vector<1x1x8x8xf32>,
    %34 = vector.extract_strided_slice %3 {offsets = [0, 48], sizes = [8, 16], strides = [1, 1]} : vector<8x128xf32> to vector<8x16xf32>
    %cst_20 = arith.constant dense<0.000000e+00> : vector<8x8xf32>
    %35 = tpu.matmul %34, %1, %cst_20 {dimension_numbers = #tpu.dot_dimension_numbers<[1], [1], [0], [0], [0, 0, 1, 0], [], []>} : vector<8x16xf32>, vector<8x16xf32>, vector<8x8xf32> -> vector<8x8xf32>
    %36 = arith.negf %35 : vector<8x8xf32>
    %37 = math.exp %36 : vector<8x8xf32>
    %cst_21 = arith.constant 1.000000e+00 : f32
    %38 = vector.broadcast %cst_21 : f32 to vector<8x8xf32>
    %39 = arith.addf %38, %37 : vector<8x8xf32>
    %40 = arith.divf %38, %39 : vector<8x8xf32>
    %c0_22 = arith.constant 0 : index
    %c3 = arith.constant 3 : index
    %c0_23 = arith.constant 0 : index
    %c0_24 = arith.constant 0 : index
    %41 = vector.load %arg3[%c0_22, %c3, %c0_23, %c0_24] : memref<1x4x8x8xf32, #tpu.memory_space<vmem>>, vector<1x1x8x8xf32>
    %42 = vector.shape_cast %41 : vector<1x1x8x8xf32> to vector<8x8xf32>
    %43 = vector.shape_cast %40 : vector<8x8xf32> to vector<1x1x8x8xf32>
    tpu.vector_store %arg3[%c0_22, %c3, %c0_23, %c0_24], %43 {strides = array<i32>} : memref<1x4x8x8xf32, #tpu.memory_space<vmem>>, vector<1x1x8x8xf32>,
    %44 = vector.extract_strided_slice %3 {offsets = [0, 64], sizes = [8, 16], strides = [1, 1]} : vector<8x128xf32> to vector<8x16xf32>
    %cst_25 = arith.constant dense<0.000000e+00> : vector<8x8xf32>
    %45 = tpu.matmul %44, %1, %cst_25 {dimension_numbers = #tpu.dot_dimension_numbers<[1], [1], [0], [0], [0, 0, 1, 0], [], []>} : vector<8x16xf32>, vector<8x16xf32>, vector<8x8xf32> -> vector<8x8xf32>
    %46 = arith.negf %45 : vector<8x8xf32>
    %47 = math.exp %46 : vector<8x8xf32>
    %cst_26 = arith.constant 1.000000e+00 : f32
    %48 = vector.broadcast %cst_26 : f32 to vector<8x8xf32>
    %49 = arith.addf %48, %47 : vector<8x8xf32>
    %50 = arith.divf %48, %49 : vector<8x8xf32>
    %c0_27 = arith.constant 0 : index
    %c0_28 = arith.constant 0 : index
    %c0_29 = arith.constant 0 : index
    %c0_30 = arith.constant 0 : index
    %51 = vector.load %arg4[%c0_27, %c0_28, %c0_29, %c0_30] : memref<1x4x8x8xf32, #tpu.memory_space<vmem>>, vector<1x1x8x8xf32>
    %52 = vector.shape_cast %51 : vector<1x1x8x8xf32> to vector<8x8xf32>
    %53 = vector.shape_cast %50 : vector<8x8xf32> to vector<1x1x8x8xf32>
    tpu.vector_store %arg4[%c0_27, %c0_28, %c0_29, %c0_30], %53 {strides = array<i32>} : memref<1x4x8x8xf32, #tpu.memory_space<vmem>>, vector<1x1x8x8xf32>,
    %54 = vector.extract_strided_slice %3 {offsets = [0, 80], sizes = [8, 16], strides = [1, 1]} : vector<8x128xf32> to vector<8x16xf32>
    %cst_31 = arith.constant dense<0.000000e+00> : vector<8x8xf32>
    %55 = tpu.matmul %54, %1, %cst_31 {dimension_numbers = #tpu.dot_dimension_numbers<[1], [1], [0], [0], [0, 0, 1, 0], [], []>} : vector<8x16xf32>, vector<8x16xf32>, vector<8x8xf32> -> vector<8x8xf32>
    %56 = arith.negf %55 : vector<8x8xf32>
    %57 = math.exp %56 : vector<8x8xf32>
    %cst_32 = arith.constant 1.000000e+00 : f32
    %58 = vector.broadcast %cst_32 : f32 to vector<8x8xf32>
    %59 = arith.addf %58, %57 : vector<8x8xf32>
    %60 = arith.divf %58, %59 : vector<8x8xf32>
    %c0_33 = arith.constant 0 : index
    %c1_34 = arith.constant 1 : index
    %c0_35 = arith.constant 0 : index
    %c0_36 = arith.constant 0 : index
    %61 = vector.load %arg4[%c0_33, %c1_34, %c0_35, %c0_36] : memref<1x4x8x8xf32, #tpu.memory_space<vmem>>, vector<1x1x8x8xf32>
    %62 = vector.shape_cast %61 : vector<1x1x8x8xf32> to vector<8x8xf32>
    %63 = vector.shape_cast %60 : vector<8x8xf32> to vector<1x1x8x8xf32>
    tpu.vector_store %arg4[%c0_33, %c1_34, %c0_35, %c0_36], %63 {strides = array<i32>} : memref<1x4x8x8xf32, #tpu.memory_space<vmem>>, vector<1x1x8x8xf32>,
    %64 = vector.extract_strided_slice %3 {offsets = [0, 96], sizes = [8, 16], strides = [1, 1]} : vector<8x128xf32> to vector<8x16xf32>
    %cst_37 = arith.constant dense<0.000000e+00> : vector<8x8xf32>
    %65 = tpu.matmul %64, %1, %cst_37 {dimension_numbers = #tpu.dot_dimension_numbers<[1], [1], [0], [0], [0, 0, 1, 0], [], []>} : vector<8x16xf32>, vector<8x16xf32>, vector<8x8xf32> -> vector<8x8xf32>
    %66 = arith.negf %65 : vector<8x8xf32>
    %67 = math.exp %66 : vector<8x8xf32>
    %cst_38 = arith.constant 1.000000e+00 : f32
    %68 = vector.broadcast %cst_38 : f32 to vector<8x8xf32>
    %69 = arith.addf %68, %67 : vector<8x8xf32>
    %70 = arith.divf %68, %69 : vector<8x8xf32>
    %c0_39 = arith.constant 0 : index
    %c2_40 = arith.constant 2 : index
    %c0_41 = arith.constant 0 : index
    %c0_42 = arith.constant 0 : index
    %71 = vector.load %arg4[%c0_39, %c2_40, %c0_41, %c0_42] : memref<1x4x8x8xf32, #tpu.memory_space<vmem>>, vector<1x1x8x8xf32>
    %72 = vector.shape_cast %71 : vector<1x1x8x8xf32> to vector<8x8xf32>
    %73 = vector.shape_cast %70 : vector<8x8xf32> to vector<1x1x8x8xf32>
    tpu.vector_store %arg4[%c0_39, %c2_40, %c0_41, %c0_42], %73 {strides = array<i32>} : memref<1x4x8x8xf32, #tpu.memory_space<vmem>>, vector<1x1x8x8xf32>,
    %74 = vector.extract_strided_slice %3 {offsets = [0, 112], sizes = [8, 16], strides = [1, 1]} : vector<8x128xf32> to vector<8x16xf32>
    %cst_43 = arith.constant dense<0.000000e+00> : vector<8x8xf32>
    %75 = tpu.matmul %74, %1, %cst_43 {dimension_numbers = #tpu.dot_dimension_numbers<[1], [1], [0], [0], [0, 0, 1, 0], [], []>} : vector<8x16xf32>, vector<8x16xf32>, vector<8x8xf32> -> vector<8x8xf32>
    %76 = arith.negf %75 : vector<8x8xf32>
    %77 = math.exp %76 : vector<8x8xf32>
    %cst_44 = arith.constant 1.000000e+00 : f32
    %78 = vector.broadcast %cst_44 : f32 to vector<8x8xf32>
    %79 = arith.addf %78, %77 : vector<8x8xf32>
    %80 = arith.divf %78, %79 : vector<8x8xf32>
    %c0_45 = arith.constant 0 : index
    %c3_46 = arith.constant 3 : index
    %c0_47 = arith.constant 0 : index
    %c0_48 = arith.constant 0 : index
    %81 = vector.load %arg4[%c0_45, %c3_46, %c0_47, %c0_48] : memref<1x4x8x8xf32, #tpu.memory_space<vmem>>, vector<1x1x8x8xf32>
    %82 = vector.shape_cast %81 : vector<1x1x8x8xf32> to vector<8x8xf32>
    %83 = vector.shape_cast %80 : vector<8x8xf32> to vector<1x1x8x8xf32>
    tpu.vector_store %arg4[%c0_45, %c3_46, %c0_47, %c0_48], %83 {strides = array<i32>} : memref<1x4x8x8xf32, #tpu.memory_space<vmem>>, vector<1x1x8x8xf32>,
    return
  }
  func.func @transform_0(%arg0: i32) -> (i32, i32, i32) {
    %c0_i32 = arith.constant 0 : i32
    %c0_i32_0 = arith.constant 0 : i32
    %c0_i32_1 = arith.constant 0 : i32
    return %arg0, %c0_i32, %c0_i32_0 : i32, i32, i32
  }
  func.func @transform_1(%arg0: i32) -> (i32, i32) {
    %c0_i32 = arith.constant 0 : i32
    %c0_i32_0 = arith.constant 0 : i32
    %c0_i32_1 = arith.constant 0 : i32
    return %c0_i32, %c0_i32_0 : i32, i32
  }
  func.func @transform_2(%arg0: i32) -> (i32, i32, i32, i32) {
    %c0_i32 = arith.constant 0 : i32
    %c0_i32_0 = arith.constant 0 : i32
    %c0_i32_1 = arith.constant 0 : i32
    %c0_i32_2 = arith.constant 0 : i32
    return %arg0, %c0_i32, %c0_i32_0, %c0_i32_1 : i32, i32, i32, i32
  }
  func.func @transform_3(%arg0: i32) -> (i32, i32, i32, i32) {
    %c0_i32 = arith.constant 0 : i32
    %c0_i32_0 = arith.constant 0 : i32
    %c0_i32_1 = arith.constant 0 : i32
    %c0_i32_2 = arith.constant 0 : i32
    return %arg0, %c0_i32, %c0_i32_0, %c0_i32_1 : i32, i32, i32, i32
  }
}

</mosaic_0001>

<llo_original>
// kernel: _lambda_.1
$region0: #{_lambda_.1}
  #allocation0 [shape = 'u32[]', space=smem, size = 0x4, offset = 0x4, fixed_abs, tag = 'smem constant byte address 0x4 - core index']
  #allocation1 [shape = 'u32[144,128]{1,0:T(1,128)}', space=vmem, size = 0x12000, scoped, tag = 'internal scratch']
  %s0 = inlined_call_operand.hbm [shape: f32[2,8,16], index: 0, kind: input, shape index: {}]
  %s1 = inlined_call_operand.hbm [shape: f32[16,128], index: 1, kind: input, shape index: {}]
  %s2 = inlined_call_operand.hbm [shape: f32[2,4,8,8], index: 2, kind: output, shape index: {0}]
  %s3 = inlined_call_operand.hbm [shape: f32[2,4,8,8], index: 3, kind: output, shape index: {1}]
  %4 = xla_tuple %s2, %s3
  %s5 = sld [smem:[#allocation0]]
  $region57: #{_lambda_.1} parent=0
    _
  %s7 = ssub.s32 1, %s5
  %s8 = scalar_select 0, %s7, %s5
  $region1: #{_lambda_.1} parent=0
    #allocation2 [shape = 'u8[8192]{0}', space=vmem, size = 0x2000, scoped, tag = 'input window, operand 0']
    #allocation3 [shape = 's32[2]{0}', space=sflag, size = 0x8, scoped, tag = 'scoped memory for _lambda_.1']
    #allocation4 [shape = 's32[2]{0}', space=sflag, size = 0x8, scoped, tag = 'scoped memory for _lambda_.1']
    #allocation5 [shape = 'u8[8192]{0}', space=vmem, size = 0x2000, scoped, tag = 'input window, operand 1, single buffered']
    #allocation6 [shape = 's32[1]{0}', space=sflag, size = 0x4, scoped, tag = 'scoped memory for _lambda_.1']
    #allocation7 [shape = 'u8[32768]{0}', space=vmem, size = 0x8000, scoped, tag = 'output window, operand 0']
    #allocation8 [shape = 'u8[32768]{0}', space=vmem, size = 0x8000, scoped, tag = 'output window, operand 1']
    #allocation9 [shape = 's32[2]{0}', space=sflag, size = 0x8, scoped, tag = 'scoped memory for _lambda_.1']
    %9 = vsyncpa [#allocation3], 0
    %s10 = scalar_lea.sflag [#allocation3], 1
    %11 = vsyncpa %s10, 0
    %12 = vsyncpa [#allocation6], 0
    %13 = vsyncpa [#allocation4], 0
    %s14 = scalar_lea.sflag [#allocation4], 1
    %15 = vsyncpa %s14, 0
    %16 = vsyncpa [#allocation9], 0
    %s17 = scalar_lea.sflag [#allocation9], 1
    %18 = vsyncpa %s17, 0
    loop: start=0, step=1, limit=4
    $region2: #{_lambda_.1} parent=1 // loop_pre_header
      _
    $region3: #{_lambda_.1} parent=1 // loop_header
      %s20 = sphi 0, %s24
      %p21 = scmp.ge.s32.totalorder %s20, 4
      %s30 = sphi 0, %s32
      %s33 = sphi 0, %s30
      %s34 = sphi 0, %s33
      %s50 = sphi 0, %s34
      %s54 = sphi 0, %s54
      %s56 = sphi 0, %s54
      %s57 = sphi 0, %s56
      %s71 = sphi 0, %s57
      %s77 = sphi 0, %s79
      %s80 = sphi 0, %s77
      %s81 = sphi 0, %s80
      %s97 = sphi 0, %s81
      %s103 = sphi 0, %s105
      %s106 = sphi 0, %s103
      %s107 = sphi 0, %s106
      %s123 = sphi 0, %s107
    $region4: #{_lambda_.1} parent=1 // loop_header_branch
      %23 = sbr.rel (%p21) target = $region8
    $region5: #{_lambda_.1} parent=1 // loop_body
      %s25 = ssub.s32 %s20, 1
      %s26 = ssub.s32 %s20, 2
      %s27 = sadd.s32 %s20, 1
      %s28 = ssub.s32 %s20, %s27
      %p29 = scmp.eq.s32.totalorder %s28, 0
      %s31 = sadd.s32 %s30, 1
      %s32 = scalar_select %p29, %s30, %s31
      %p35 = pneg %p29
      %p36 = scmp.eq.s32.totalorder %s20, 1
      %p37 = por %p35, %p36
      %p38 = scmp.ne.s32.totalorder %s30, %s33
      %p39 = scmp.eq.s32.totalorder %s20, 0
      %p40 = por %p38, %p39
      %p41 = scmp.ne.s32.totalorder %s30, %s33
      %p42 = scmp.eq.s32.totalorder %s25, 1
      %p43 = por %p41, %p42
      %p44 = scmp.ne.s32.totalorder %s33, %s34
      %p45 = scmp.eq.s32.totalorder %s25, 0
      %p46 = por %p44, %p45
      %p47 = scmp.ne.s32.totalorder %s33, %s34
      %p48 = scmp.eq.s32.totalorder %s26, 1
      %p49 = por %p47, %p48
      %p51 = scmp.ne.s32.totalorder %s34, %s50
      %p52 = scmp.eq.s32.totalorder %s26, 0
      %p53 = por %p51, %p52
      %s55 = sadd.s32 %s54, 1
      %p58 = scmp.eq.s32.totalorder %s20, 1
      %p59 = scmp.ne.s32.totalorder %s54, %s56
      %p60 = scmp.eq.s32.totalorder %s20, 0
      %p61 = por %p59, %p60
      %p62 = scmp.ne.s32.totalorder %s54, %s56
      %p63 = scmp.eq.s32.totalorder %s25, 1
      %p64 = por %p62, %p63
      %p65 = scmp.ne.s32.totalorder %s56, %s57
      %p66 = scmp.eq.s32.totalorder %s25, 0
      %p67 = por %p65, %p66
      %p68 = scmp.ne.s32.totalorder %s56, %s57
      %p69 = scmp.eq.s32.totalorder %s26, 1
      %p70 = por %p68, %p69
      %p72 = scmp.ne.s32.totalorder %s57, %s71
      %p73 = scmp.eq.s32.totalorder %s26, 0
      %p74 = por %p72, %p73
      %s75 = ssub.s32 %s20, %s27
      %p76 = scmp.eq.s32.totalorder %s75, 0
      %s78 = sadd.s32 %s77, 1
      %s79 = scalar_select %p76, %s77, %s78
      %p82 = pneg %p76
      %p83 = scmp.eq.s32.totalorder %s20, 1
      %p84 = por %p82, %p83
      %p85 = scmp.ne.s32.totalorder %s77, %s80
      %p86 = scmp.eq.s32.totalorder %s20, 0
      %p87 = por %p85, %p86
      %p88 = scmp.ne.s32.totalorder %s77, %s80
      %p89 = scmp.eq.s32.totalorder %s25, 1
      %p90 = por %p88, %p89
      %p91 = scmp.ne.s32.totalorder %s80, %s81
      %p92 = scmp.eq.s32.totalorder %s25, 0
      %p93 = por %p91, %p92
      %p94 = scmp.ne.s32.totalorder %s80, %s81
      %p95 = scmp.eq.s32.totalorder %s26, 1
      %p96 = por %p94, %p95
      %p98 = scmp.ne.s32.totalorder %s81, %s97
      %p99 = scmp.eq.s32.totalorder %s26, 0
      %p100 = por %p98, %p99
      %s101 = ssub.s32 %s20, %s27
      %p102 = scmp.eq.s32.totalorder %s101, 0
      %s104 = sadd.s32 %s103, 1
      %s105 = scalar_select %p102, %s103, %s104
      %p108 = pneg %p102
      %p109 = scmp.eq.s32.totalorder %s20, 1
      %p110 = por %p108, %p109
      %p111 = scmp.ne.s32.totalorder %s103, %s106
      %p112 = scmp.eq.s32.totalorder %s20, 0
      %p113 = por %p111, %p112
      %p114 = scmp.ne.s32.totalorder %s103, %s106
      %p115 = scmp.eq.s32.totalorder %s25, 1
      %p116 = por %p114, %p115
      %p117 = scmp.ne.s32.totalorder %s106, %s107
      %p118 = scmp.eq.s32.totalorder %s25, 0
      %p119 = por %p117, %p118
      %p120 = scmp.ne.s32.totalorder %s106, %s107
      %p121 = scmp.eq.s32.totalorder %s26, 1
      %p122 = por %p120, %p121
      %p124 = scmp.ne.s32.totalorder %s107, %s123
      %p125 = scmp.eq.s32.totalorder %s26, 0
      %p126 = por %p124, %p125
      %p127 = scmp.le.s32.totalorder 1, %s20
      %p128 = scmp.lt.s32.totalorder %s20, 3
      %p129 = pnand %p127, %p128
      %p130 = pneg %p129
      // Predicated region
      $region9: #{_lambda_.1} parent=5 // pred_check
        _
      $region10: #{_lambda_.1} parent=5 // pred_check_branch
        %132 = sbr.rel (%p129) target = $region12
      $region11: #{_lambda_.1} parent=5 // pred_region
        %s133 = ssub.s32 %s20, 1
        // Predicated region
        $region13: #{_lambda_.1} parent=11 // pred_check
          %p134 = pneg %p67
        $region14: #{_lambda_.1} parent=11 // pred_check_branch
          %136 = sbr.rel (%p134) target = $region16
        $region15: #{_lambda_.1} parent=11 // pred_region
          %s138 = ssub.s32 256, 256
          %139 = vsyncadd [#allocation6], %s138
          %s140 = sshll.u32 [#allocation5], 4
          %s141 = int_to_ptr.vmem [resolvable:$true] %s140
          %146 = dma.hbm_to_vmem [thread:$0]  %s1, 256, %s141, [#allocation6], 128, 128, 8
        $region16: #{_lambda_.1} parent=11 // pred_fallthru
          _
      $region12: #{_lambda_.1} parent=5 // pred_fallthru
        _
      %p147 = scmp.lt.s32.totalorder %s20, 2
      // Predicated region
      $region17: #{_lambda_.1} parent=5 // pred_check
        %p148 = pneg %p147
      $region18: #{_lambda_.1} parent=5 // pred_check_branch
        %150 = sbr.rel (%p148) target = $region20
      $region19: #{_lambda_.1} parent=5 // pred_region
        // Predicated region
        $region21: #{_lambda_.1} parent=19 // pred_check
          %p151 = pneg %p40
        $region22: #{_lambda_.1} parent=19 // pred_check_branch
          %153 = sbr.rel (%p151) target = $region24
        $region23: #{_lambda_.1} parent=19 // pred_region
          %s154 = sand.u32 %s30, 1
          %s155 = scalar_lea.sflag [#allocation3], %s154
          %s156 = sand.u32 %s30, 1
          %s157 = smul.addr %s156, 8
          %s158 = scalar_lea.vmem [#allocation2], %s157
          %s160 = ssub.s32 128, 128
          %161 = vsyncadd %s155, %s160
          %s162 = smul.addr %s20, 128
          %s163 = scalar_lea.hbm %s0, %s162
          %s165 = sshll.u32 %s158, 4
          %s166 = int_to_ptr.vmem [resolvable:$true] %s165
          %168 = dma.hbm_to_vmem [thread:$0]  %s163, 128, %s166, %s155
        $region24: #{_lambda_.1} parent=19 // pred_fallthru
          _
      $region20: #{_lambda_.1} parent=5 // pred_fallthru
        _
      %p169 = scmp.le.s32.totalorder 1, %s20
      %p170 = scmp.lt.s32.totalorder %s20, 3
      %p171 = pnand %p169, %p170
      %p172 = pneg %p171
      // Predicated region
      $region25: #{_lambda_.1} parent=5 // pred_check
        _
      $region26: #{_lambda_.1} parent=5 // pred_check_branch
        %174 = sbr.rel (%p171) target = $region28
      $region27: #{_lambda_.1} parent=5 // pred_region
        %s175 = ssub.s32 %s20, 1
        %s176 = sand.u32 %s33, 1
        %s177 = scalar_lea.sflag [#allocation3], %s176
        %s178 = sand.u32 %s33, 1
        %s179 = smul.addr %s178, 8
        %s180 = scalar_lea.vmem [#allocation2], %s179
        // Predicated region
        $region29: #{_lambda_.1} parent=27 // pred_check
          %p181 = pneg %p46
        $region30: #{_lambda_.1} parent=27 // pred_check_branch
          %183 = sbr.rel (%p181) target = $region32
        $region31: #{_lambda_.1} parent=27 // pred_region
          %184 = dma.done %s177, 128
        $region32: #{_lambda_.1} parent=27 // pred_fallthru
          _
        // Predicated region
        $region33: #{_lambda_.1} parent=27 // pred_check
          %p185 = pneg %p67
        $region34: #{_lambda_.1} parent=27 // pred_check_branch
          %187 = sbr.rel (%p185) target = $region36
        $region35: #{_lambda_.1} parent=27 // pred_region
          %188 = dma.done [#allocation6], 256
        $region36: #{_lambda_.1} parent=27 // pred_fallthru
          _
        %s189 = sand.u32 %s33, 1
        %s190 = scalar_lea.sflag [#allocation3], %s189
        %s191 = sand.u32 %s33, 1
        %s192 = smul.addr %s191, 8
        %s193 = scalar_lea.vmem [#allocation2], %s192
        %p194 = pneg %p46
        %p195 = pneg %p43
        %p196 = pneg %p67
        %p197 = pneg %p64
        %p198 = pneg %p93
        %p199 = pneg %p90
        %s200 = sand.u32 %s80, 1
        %s201 = scalar_lea.sflag [#allocation4], %s200
        %s202 = sand.u32 %s80, 1
        %s203 = smul.addr %s202, 32
        %s204 = scalar_lea.vmem [#allocation7], %s203
        %p205 = pneg %p119
        %p206 = pneg %p116
        %s207 = sand.u32 %s106, 1
        %s208 = scalar_lea.sflag [#allocation9], %s207
        %s209 = sand.u32 %s106, 1
        %s210 = smul.addr %s209, 32
        %s211 = scalar_lea.vmem [#allocation8], %s210
        %v212 = vld [vmem:[%s180] sm:$0xff]
        %v213 = vld [vmem:[#allocation5] sm:$0xff]
        %v214 = vld [vmem:[#allocation5 + $0x8] sm:$0xff]
        %vm215 = vcmask 130048
        %v217 = vsel %vm215, %v212, 0
        %219 = vmatprep.subr.mxu0 0.0
        %220 = vmatpush1.msra.mxu0 %v213
        %221 = vmatprep.subr.mxu0 0.0
        %222 = vmatpush1.msra.mxu0 %v214
        %223 = vmatprep.subr.mxu0 0.0
        %224 = vmatpush1.msra.mxu0 0.0
        %225 = vmatprep.subr.mxu0 0.0
        %226 = vmatpush1.msra.mxu0 0.0
        %227 = vmatprep.subr.mxu0 0.0
        %228 = vmatpush1.msra.mxu0 0.0
        %229 = vmatprep.subr.mxu0 0.0
        %230 = vmatpush1.msra.mxu0 0.0
        %231 = vmatprep.subr.mxu0 0.0
        %232 = vmatpush1.msra.mxu0 0.0
        %233 = vmatprep.subr.mxu0 0.0
        %234 = vmatpush1.msra.mxu0 0.0
        %235 = vmatprep.subr.mxu0 0.0
        %236 = vmatpush1.msra.mxu0 0.0
        %237 = vmatprep.subr.mxu0 0.0
        %238 = vmatpush1.msra.mxu0 0.0
        %239 = vmatprep.subr.mxu0 0.0
        %240 = vmatpush1.msra.mxu0 0.0
        %241 = vmatprep.subr.mxu0 0.0
        %242 = vmatpush1.msra.mxu0 0.0
        %243 = vmatprep.subr.mxu0 0.0
        %244 = vmatpush1.msra.mxu0 0.0
        %245 = vmatprep.subr.mxu0 0.0
        %246 = vmatpush1.msra.mxu0 0.0
        %247 = vmatprep.subr.mxu0 0.0
        %248 = vmatpush1.msra.mxu0 0.0
        %249 = vmatprep.subr.mxu0 0.0
        %250 = vmatpush1.msra.mxu0 0.0
        %251 = vmatprep.subr.mxu0 0.0
        %252 = vmatpush1.msra.mxu0 0.0
        %253 = vmatprep.subr.mxu0 0.0
        %254 = vmatpush1.msra.mxu0 0.0
        %255 = vmatprep.subr.mxu0 0.0
        %256 = vmatpush1.msra.mxu0 0.0
        %257 = vmatprep.subr.mxu0 0.0
        %258 = vmatpush1.msra.mxu0 0.0
        %259 = vmatprep.subr.mxu0 0.0
        %260 = vmatpush1.msra.mxu0 0.0
        %261 = vmatprep.subr.mxu0 0.0
        %262 = vmatpush1.msra.mxu0 0.0
        %263 = vmatprep.subr.mxu0 0.0
        %264 = vmatpush1.msra.mxu0 0.0
        %265 = vmatprep.subr.mxu0 0.0
        %266 = vmatpush1.msra.mxu0 0.0
        %267 = vmatprep.subr.mxu0 0.0
        %268 = vmatpush1.msra.mxu0 0.0
        %269 = vmatprep.subr.mxu0 0.0
        %270 = vmatpush1.msra.mxu0 0.0
        %271 = vmatprep.subr.mxu0 0.0
        %272 = vmatpush1.msra.mxu0 0.0
        %273 = vmatprep.subr.mxu0 0.0
        %274 = vmatpush1.msra.mxu0 0.0
        %275 = vmatprep.subr.mxu0 0.0
        %276 = vmatpush1.msra.mxu0 0.0
        %277 = vmatprep.subr.mxu0 0.0
        %278 = vmatpush1.msra.mxu0 0.0
        %279 = vmatprep.subr.mxu0 0.0
        %280 = vmatpush1.msra.mxu0 0.0
        %281 = vmatprep.subr.mxu0 0.0
        %282 = vmatpush1.msra.mxu0 0.0
        %283 = vmatprep.mubr.f32.mxu0 0.0
        %284 = vmatmul.mubr.f32.gmra.mrb[0].mxu0 %v217
        %v285 = vpop.f32.mrb[0].mxu0
        %v286 = vadd.f32 0.0, %v285
        %v287 = vpop.f32.mrb[0].mxu0
        %288 = vdwg.mxu0
        %v290 = vsel %vm215, %v286, 0
        %292 = vmatprep.subr.mxu0 0.0
        %293 = vmatpush1.xpose.msra.mxu0 %v217
        %294 = vmatprep.subr.mxu0 0.0
        %295 = vmatpush1.xpose.msra.mxu0 0.0
        %296 = vmatprep.subr.mxu0 0.0
        %297 = vmatpush1.xpose.msra.mxu0 0.0
        %298 = vmatprep.subr.mxu0 0.0
        %299 = vmatpush1.xpose.msra.mxu0 0.0
        %300 = vmatprep.subr.mxu0 0.0
        %301 = vmatpush1.xpose.msra.mxu0 0.0
        %302 = vmatprep.subr.mxu0 0.0
        %303 = vmatpush1.xpose.msra.mxu0 0.0
        %304 = vmatprep.subr.mxu0 0.0
        %305 = vmatpush1.xpose.msra.mxu0 0.0
        %306 = vmatprep.subr.mxu0 0.0
        %307 = vmatpush1.xpose.msra.mxu0 0.0
        %308 = vmatprep.subr.mxu0 0.0
        %309 = vmatpush1.xpose.msra.mxu0 0.0
        %310 = vmatprep.subr.mxu0 0.0
        %311 = vmatpush1.xpose.msra.mxu0 0.0
        %312 = vmatprep.subr.mxu0 0.0
        %313 = vmatpush1.xpose.msra.mxu0 0.0
        %314 = vmatprep.subr.mxu0 0.0
        %315 = vmatpush1.xpose.msra.mxu0 0.0
        %316 = vmatprep.subr.mxu0 0.0
        %317 = vmatpush1.xpose.msra.mxu0 0.0
        %318 = vmatprep.subr.mxu0 0.0
        %319 = vmatpush1.xpose.msra.mxu0 0.0
        %320 = vmatprep.subr.mxu0 0.0
        %321 = vmatpush1.xpose.msra.mxu0 0.0
        %322 = vmatprep.subr.mxu0 0.0
        %323 = vmatpush1.xpose.msra.mxu0 0.0
        %324 = vmatprep.subr.mxu0 0.0
        %325 = vmatpush1.xpose.msra.mxu0 0.0
        %326 = vmatprep.subr.mxu0 0.0
        %327 = vmatpush1.xpose.msra.mxu0 0.0
        %328 = vmatprep.subr.mxu0 0.0
        %329 = vmatpush1.xpose.msra.mxu0 0.0
        %330 = vmatprep.subr.mxu0 0.0
        %331 = vmatpush1.xpose.msra.mxu0 0.0
        %332 = vmatprep.subr.mxu0 0.0
        %333 = vmatpush1.xpose.msra.mxu0 0.0
        %334 = vmatprep.subr.mxu0 0.0
        %335 = vmatpush1.xpose.msra.mxu0 0.0
        %336 = vmatprep.subr.mxu0 0.0
        %337 = vmatpush1.xpose.msra.mxu0 0.0
        %338 = vmatprep.subr.mxu0 0.0
        %339 = vmatpush1.xpose.msra.mxu0 0.0
        %340 = vmatprep.subr.mxu0 0.0
        %341 = vmatpush1.xpose.msra.mxu0 0.0
        %342 = vmatprep.subr.mxu0 0.0
        %343 = vmatpush1.xpose.msra.mxu0 0.0
        %344 = vmatprep.subr.mxu0 0.0
        %345 = vmatpush1.xpose.msra.mxu0 0.0
        %346 = vmatprep.subr.mxu0 0.0
        %347 = vmatpush1.xpose.msra.mxu0 0.0
        %348 = vmatprep.subr.mxu0 0.0
        %349 = vmatpush1.xpose.msra.mxu0 0.0
        %350 = vmatprep.subr.mxu0 0.0
        %351 = vmatpush1.xpose.msra.mxu0 0.0
        %352 = vmatprep.subr.mxu0 0.0
        %353 = vmatpush1.xpose.msra.mxu0 0.0
        %354 = vmatprep.subr.mxu0 0.0
        %355 = vmatpush1.xpose.msra.mxu0 0.0
        %356 = vmatprep.mubr.f32.mxu0 0.0
        %357 = vmatmul.mubr.f32.gmra.mrb[0].mxu0 %v290
        %v358 = vpop.f32.mrb[0].mxu0
        %v359 = vadd.f32 0.0, %v358
        %v360 = vpop.f32.mrb[0].mxu0
        %361 = vdwg.mxu0
        %v362 = vxor.u32 %v359, 2147483648
        %v363 = vmul.f32 %v362, 1.442695
        %v364 = vpow.pop %v363
        %v365 = vadd.f32 %v364, 1.0
        %v366 = vrcp.pop %v365
        %v367 = vmul.f32 1.0, %v366
        %vm368 = vcmask 64512
        %369 = vst.msk [vmem:[%s204] sm:$0xff] %vm368, %v367
        %370 = vrot.lane.b32.xlu0 %v286, 112
        %v371 = vpop.permute.xlu0 %370
        %v372 = vsel %vm215, %v371, 0
        %374 = vmatprep.subr.mxu0 0.0
        %375 = vmatpush1.xpose.msra.mxu0 %v217
        %376 = vmatprep.subr.mxu0 0.0
        %377 = vmatpush1.xpose.msra.mxu0 0.0
        %378 = vmatprep.subr.mxu0 0.0
        %379 = vmatpush1.xpose.msra.mxu0 0.0
        %380 = vmatprep.subr.mxu0 0.0
        %381 = vmatpush1.xpose.msra.mxu0 0.0
        %382 = vmatprep.subr.mxu0 0.0
        %383 = vmatpush1.xpose.msra.mxu0 0.0
        %384 = vmatprep.subr.mxu0 0.0
        %385 = vmatpush1.xpose.msra.mxu0 0.0
        %386 = vmatprep.subr.mxu0 0.0
        %387 = vmatpush1.xpose.msra.mxu0 0.0
        %388 = vmatprep.subr.mxu0 0.0
        %389 = vmatpush1.xpose.msra.mxu0 0.0
        %390 = vmatprep.subr.mxu0 0.0
        %391 = vmatpush1.xpose.msra.mxu0 0.0
        %392 = vmatprep.subr.mxu0 0.0
        %393 = vmatpush1.xpose.msra.mxu0 0.0
        %394 = vmatprep.subr.mxu0 0.0
        %395 = vmatpush1.xpose.msra.mxu0 0.0
        %396 = vmatprep.subr.mxu0 0.0
        %397 = vmatpush1.xpose.msra.mxu0 0.0
        %398 = vmatprep.subr.mxu0 0.0
        %399 = vmatpush1.xpose.msra.mxu0 0.0
        %400 = vmatprep.subr.mxu0 0.0
        %401 = vmatpush1.xpose.msra.mxu0 0.0
        %402 = vmatprep.subr.mxu0 0.0
        %403 = vmatpush1.xpose.msra.mxu0 0.0
        %404 = vmatprep.subr.mxu0 0.0
        %405 = vmatpush1.xpose.msra.mxu0 0.0
        %406 = vmatprep.subr.mxu0 0.0
        %407 = vmatpush1.xpose.msra.mxu0 0.0
        %408 = vmatprep.subr.mxu0 0.0
        %409 = vmatpush1.xpose.msra.mxu0 0.0
        %410 = vmatprep.subr.mxu0 0.0
        %411 = vmatpush1.xpose.msra.mxu0 0.0
        %412 = vmatprep.subr.mxu0 0.0
        %413 = vmatpush1.xpose.msra.mxu0 0.0
        %414 = vmatprep.subr.mxu0 0.0
        %415 = vmatpush1.xpose.msra.mxu0 0.0
        %416 = vmatprep.subr.mxu0 0.0
        %417 = vmatpush1.xpose.msra.mxu0 0.0
        %418 = vmatprep.subr.mxu0 0.0
        %419 = vmatpush1.xpose.msra.mxu0 0.0
        %420 = vmatprep.subr.mxu0 0.0
        %421 = vmatpush1.xpose.msra.mxu0 0.0
        %422 = vmatprep.subr.mxu0 0.0
        %423 = vmatpush1.xpose.msra.mxu0 0.0
        %424 = vmatprep.subr.mxu0 0.0
        %425 = vmatpush1.xpose.msra.mxu0 0.0
        %426 = vmatprep.subr.mxu0 0.0
        %427 = vmatpush1.xpose.msra.mxu0 0.0
        %428 = vmatprep.subr.mxu0 0.0
        %429 = vmatpush1.xpose.msra.mxu0 0.0
        %430 = vmatprep.subr.mxu0 0.0
        %431 = vmatpush1.xpose.msra.mxu0 0.0
        %432 = vmatprep.subr.mxu0 0.0
        %433 = vmatpush1.xpose.msra.mxu0 0.0
        %434 = vmatprep.subr.mxu0 0.0
        %435 = vmatpush1.xpose.msra.mxu0 0.0
        %436 = vmatprep.subr.mxu0 0.0
        %437 = vmatpush1.xpose.msra.mxu0 0.0
        %438 = vmatprep.mubr.f32.mxu0 0.0
        %439 = vmatmul.mubr.f32.gmra.mrb[0].mxu0 %v372
        %v440 = vpop.f32.mrb[0].mxu0
        %v441 = vadd.f32 0.0, %v440
        %v442 = vpop.f32.mrb[0].mxu0
        %443 = vdwg.mxu0
        %v444 = vxor.u32 %v441, 2147483648
        %v445 = vmul.f32 %v444, 1.442695
        %v446 = vpow.pop %v445
        %v447 = vadd.f32 %v446, 1.0
        %v448 = vrcp.pop %v447
        %v449 = vmul.f32 1.0, %v448
        %s450 = scalar_lea.vmem %s204, 8 [#allocation7]
        %451 = vst.msk [vmem:[%s450] sm:$0xff] %vm368, %v449
        %452 = vrot.lane.b32.xlu0 %v286, 96
        %v453 = vpop.permute.xlu0 %452
        %v454 = vsel %vm215, %v453, 0
        %456 = vmatprep.subr.mxu0 0.0
        %457 = vmatpush1.xpose.msra.mxu0 %v217
        %458 = vmatprep.subr.mxu0 0.0
        %459 = vmatpush1.xpose.msra.mxu0 0.0
        %460 = vmatprep.subr.mxu0 0.0
        %461 = vmatpush1.xpose.msra.mxu0 0.0
        %462 = vmatprep.subr.mxu0 0.0
        %463 = vmatpush1.xpose.msra.mxu0 0.0
        %464 = vmatprep.subr.mxu0 0.0
        %465 = vmatpush1.xpose.msra.mxu0 0.0
        %466 = vmatprep.subr.mxu0 0.0
        %467 = vmatpush1.xpose.msra.mxu0 0.0
        %468 = vmatprep.subr.mxu0 0.0
        %469 = vmatpush1.xpose.msra.mxu0 0.0
        %470 = vmatprep.subr.mxu0 0.0
        %471 = vmatpush1.xpose.msra.mxu0 0.0
        %472 = vmatprep.subr.mxu0 0.0
        %473 = vmatpush1.xpose.msra.mxu0 0.0
        %474 = vmatprep.subr.mxu0 0.0
        %475 = vmatpush1.xpose.msra.mxu0 0.0
        %476 = vmatprep.subr.mxu0 0.0
        %477 = vmatpush1.xpose.msra.mxu0 0.0
        %478 = vmatprep.subr.mxu0 0.0
        %479 = vmatpush1.xpose.msra.mxu0 0.0
        %480 = vmatprep.subr.mxu0 0.0
        %481 = vmatpush1.xpose.msra.mxu0 0.0
        %482 = vmatprep.subr.mxu0 0.0
        %483 = vmatpush1.xpose.msra.mxu0 0.0
        %484 = vmatprep.subr.mxu0 0.0
        %485 = vmatpush1.xpose.msra.mxu0 0.0
        %486 = vmatprep.subr.mxu0 0.0
        %487 = vmatpush1.xpose.msra.mxu0 0.0
        %488 = vmatprep.subr.mxu0 0.0
        %489 = vmatpush1.xpose.msra.mxu0 0.0
        %490 = vmatprep.subr.mxu0 0.0
        %491 = vmatpush1.xpose.msra.mxu0 0.0
        %492 = vmatprep.subr.mxu0 0.0
        %493 = vmatpush1.xpose.msra.mxu0 0.0
        %494 = vmatprep.subr.mxu0 0.0
        %495 = vmatpush1.xpose.msra.mxu0 0.0
        %496 = vmatprep.subr.mxu0 0.0
        %497 = vmatpush1.xpose.msra.mxu0 0.0
        %498 = vmatprep.subr.mxu0 0.0
        %499 = vmatpush1.xpose.msra.mxu0 0.0
        %500 = vmatprep.subr.mxu0 0.0
        %501 = vmatpush1.xpose.msra.mxu0 0.0
        %502 = vmatprep.subr.mxu0 0.0
        %503 = vmatpush1.xpose.msra.mxu0 0.0
        %504 = vmatprep.subr.mxu0 0.0
        %505 = vmatpush1.xpose.msra.mxu0 0.0
        %506 = vmatprep.subr.mxu0 0.0
        %507 = vmatpush1.xpose.msra.mxu0 0.0
        %508 = vmatprep.subr.mxu0 0.0
        %509 = vmatpush1.xpose.msra.mxu0 0.0
        %510 = vmatprep.subr.mxu0 0.0
        %511 = vmatpush1.xpose.msra.mxu0 0.0
        %512 = vmatprep.subr.mxu0 0.0
        %513 = vmatpush1.xpose.msra.mxu0 0.0
        %514 = vmatprep.subr.mxu0 0.0
        %515 = vmatpush1.xpose.msra.mxu0 0.0
        %516 = vmatprep.subr.mxu0 0.0
        %517 = vmatpush1.xpose.msra.mxu0 0.0
        %518 = vmatprep.subr.mxu0 0.0
        %519 = vmatpush1.xpose.msra.mxu0 0.0
        %520 = vmatprep.mubr.f32.mxu0 0.0
        %521 = vmatmul.mubr.f32.gmra.mrb[0].mxu0 %v454
        %v522 = vpop.f32.mrb[0].mxu0
        %v523 = vadd.f32 0.0, %v522
        %v524 = vpop.f32.mrb[0].mxu0
        %525 = vdwg.mxu0
        %v526 = vxor.u32 %v523, 2147483648
        %v527 = vmul.f32 %v526, 1.442695
        %v528 = vpow.pop %v527
        %v529 = vadd.f32 %v528, 1.0
        %v530 = vrcp.pop %v529
        %v531 = vmul.f32 1.0, %v530
        %s532 = scalar_lea.vmem %s204, 16 [#allocation7]
        %533 = vst.msk [vmem:[%s532] sm:$0xff] %vm368, %v531
        %534 = vrot.lane.b32.xlu0 %v286, 80
        %v535 = vpop.permute.xlu0 %534
        %v536 = vsel %vm215, %v535, 0
        %538 = vmatprep.subr.mxu0 0.0
        %539 = vmatpush1.xpose.msra.mxu0 %v217
        %540 = vmatprep.subr.mxu0 0.0
        %541 = vmatpush1.xpose.msra.mxu0 0.0
        %542 = vmatprep.subr.mxu0 0.0
        %543 = vmatpush1.xpose.msra.mxu0 0.0
        %544 = vmatprep.subr.mxu0 0.0
        %545 = vmatpush1.xpose.msra.mxu0 0.0
        %546 = vmatprep.subr.mxu0 0.0
        %547 = vmatpush1.xpose.msra.mxu0 0.0
        %548 = vmatprep.subr.mxu0 0.0
        %549 = vmatpush1.xpose.msra.mxu0 0.0
        %550 = vmatprep.subr.mxu0 0.0
        %551 = vmatpush1.xpose.msra.mxu0 0.0
        %552 = vmatprep.subr.mxu0 0.0
        %553 = vmatpush1.xpose.msra.mxu0 0.0
        %554 = vmatprep.subr.mxu0 0.0
        %555 = vmatpush1.xpose.msra.mxu0 0.0
        %556 = vmatprep.subr.mxu0 0.0
        %557 = vmatpush1.xpose.msra.mxu0 0.0
        %558 = vmatprep.subr.mxu0 0.0
        %559 = vmatpush1.xpose.msra.mxu0 0.0
        %560 = vmatprep.subr.mxu0 0.0
        %561 = vmatpush1.xpose.msra.mxu0 0.0
        %562 = vmatprep.subr.mxu0 0.0
        %563 = vmatpush1.xpose.msra.mxu0 0.0
        %564 = vmatprep.subr.mxu0 0.0
        %565 = vmatpush1.xpose.msra.mxu0 0.0
        %566 = vmatprep.subr.mxu0 0.0
        %567 = vmatpush1.xpose.msra.mxu0 0.0
        %568 = vmatprep.subr.mxu0 0.0
        %569 = vmatpush1.xpose.msra.mxu0 0.0
        %570 = vmatprep.subr.mxu0 0.0
        %571 = vmatpush1.xpose.msra.mxu0 0.0
        %572 = vmatprep.subr.mxu0 0.0
        %573 = vmatpush1.xpose.msra.mxu0 0.0
        %574 = vmatprep.subr.mxu0 0.0
        %575 = vmatpush1.xpose.msra.mxu0 0.0
        %576 = vmatprep.subr.mxu0 0.0
        %577 = vmatpush1.xpose.msra.mxu0 0.0
        %578 = vmatprep.subr.mxu0 0.0
        %579 = vmatpush1.xpose.msra.mxu0 0.0
        %580 = vmatprep.subr.mxu0 0.0
        %581 = vmatpush1.xpose.msra.mxu0 0.0
        %582 = vmatprep.subr.mxu0 0.0
        %583 = vmatpush1.xpose.msra.mxu0 0.0
        %584 = vmatprep.subr.mxu0 0.0
        %585 = vmatpush1.xpose.msra.mxu0 0.0
        %586 = vmatprep.subr.mxu0 0.0
        %587 = vmatpush1.xpose.msra.mxu0 0.0
        %588 = vmatprep.subr.mxu0 0.0
        %589 = vmatpush1.xpose.msra.mxu0 0.0
        %590 = vmatprep.subr.mxu0 0.0
        %591 = vmatpush1.xpose.msra.mxu0 0.0
        %592 = vmatprep.subr.mxu0 0.0
        %593 = vmatpush1.xpose.msra.mxu0 0.0
        %594 = vmatprep.subr.mxu0 0.0
        %595 = vmatpush1.xpose.msra.mxu0 0.0
        %596 = vmatprep.subr.mxu0 0.0
        %597 = vmatpush1.xpose.msra.mxu0 0.0
        %598 = vmatprep.subr.mxu0 0.0
        %599 = vmatpush1.xpose.msra.mxu0 0.0
        %600 = vmatprep.subr.mxu0 0.0
        %601 = vmatpush1.xpose.msra.mxu0 0.0
        %602 = vmatprep.mubr.f32.mxu0 0.0
        %603 = vmatmul.mubr.f32.gmra.mrb[0].mxu0 %v536
        %v604 = vpop.f32.mrb[0].mxu0
        %v605 = vadd.f32 0.0, %v604
        %v606 = vpop.f32.mrb[0].mxu0
        %607 = vdwg.mxu0
        %v608 = vxor.u32 %v605, 2147483648
        %v609 = vmul.f32 %v608, 1.442695
        %v610 = vpow.pop %v609
        %v611 = vadd.f32 %v610, 1.0
        %v612 = vrcp.pop %v611
        %v613 = vmul.f32 1.0, %v612
        %s614 = scalar_lea.vmem %s204, 24 [#allocation7]
        %615 = vst.msk [vmem:[%s614] sm:$0xff] %vm368, %v613
        %616 = vrot.lane.b32.xlu0 %v286, 64
        %v617 = vpop.permute.xlu0 %616
        %v618 = vsel %vm215, %v617, 0
        %620 = vmatprep.subr.mxu0 0.0
        %621 = vmatpush1.xpose.msra.mxu0 %v217
        %622 = vmatprep.subr.mxu0 0.0
        %623 = vmatpush1.xpose.msra.mxu0 0.0
        %624 = vmatprep.subr.mxu0 0.0
        %625 = vmatpush1.xpose.msra.mxu0 0.0
        %626 = vmatprep.subr.mxu0 0.0
        %627 = vmatpush1.xpose.msra.mxu0 0.0
        %628 = vmatprep.subr.mxu0 0.0
        %629 = vmatpush1.xpose.msra.mxu0 0.0
        %630 = vmatprep.subr.mxu0 0.0
        %631 = vmatpush1.xpose.msra.mxu0 0.0
        %632 = vmatprep.subr.mxu0 0.0
        %633 = vmatpush1.xpose.msra.mxu0 0.0
        %634 = vmatprep.subr.mxu0 0.0
        %635 = vmatpush1.xpose.msra.mxu0 0.0
        %636 = vmatprep.subr.mxu0 0.0
        %637 = vmatpush1.xpose.msra.mxu0 0.0
        %638 = vmatprep.subr.mxu0 0.0
        %639 = vmatpush1.xpose.msra.mxu0 0.0
        %640 = vmatprep.subr.mxu0 0.0
        %641 = vmatpush1.xpose.msra.mxu0 0.0
        %642 = vmatprep.subr.mxu0 0.0
        %643 = vmatpush1.xpose.msra.mxu0 0.0
        %644 = vmatprep.subr.mxu0 0.0
        %645 = vmatpush1.xpose.msra.mxu0 0.0
        %646 = vmatprep.subr.mxu0 0.0
        %647 = vmatpush1.xpose.msra.mxu0 0.0
        %648 = vmatprep.subr.mxu0 0.0
        %649 = vmatpush1.xpose.msra.mxu0 0.0
        %650 = vmatprep.subr.mxu0 0.0
        %651 = vmatpush1.xpose.msra.mxu0 0.0
        %652 = vmatprep.subr.mxu0 0.0
        %653 = vmatpush1.xpose.msra.mxu0 0.0
        %654 = vmatprep.subr.mxu0 0.0
        %655 = vmatpush1.xpose.msra.mxu0 0.0
        %656 = vmatprep.subr.mxu0 0.0
        %657 = vmatpush1.xpose.msra.mxu0 0.0
        %658 = vmatprep.subr.mxu0 0.0
        %659 = vmatpush1.xpose.msra.mxu0 0.0
        %660 = vmatprep.subr.mxu0 0.0
        %661 = vmatpush1.xpose.msra.mxu0 0.0
        %662 = vmatprep.subr.mxu0 0.0
        %663 = vmatpush1.xpose.msra.mxu0 0.0
        %664 = vmatprep.subr.mxu0 0.0
        %665 = vmatpush1.xpose.msra.mxu0 0.0
        %666 = vmatprep.subr.mxu0 0.0
        %667 = vmatpush1.xpose.msra.mxu0 0.0
        %668 = vmatprep.subr.mxu0 0.0
        %669 = vmatpush1.xpose.msra.mxu0 0.0
        %670 = vmatprep.subr.mxu0 0.0
        %671 = vmatpush1.xpose.msra.mxu0 0.0
        %672 = vmatprep.subr.mxu0 0.0
        %673 = vmatpush1.xpose.msra.mxu0 0.0
        %674 = vmatprep.subr.mxu0 0.0
        %675 = vmatpush1.xpose.msra.mxu0 0.0
        %676 = vmatprep.subr.mxu0 0.0
        %677 = vmatpush1.xpose.msra.mxu0 0.0
        %678 = vmatprep.subr.mxu0 0.0
        %679 = vmatpush1.xpose.msra.mxu0 0.0
        %680 = vmatprep.subr.mxu0 0.0
        %681 = vmatpush1.xpose.msra.mxu0 0.0
        %682 = vmatprep.subr.mxu0 0.0
        %683 = vmatpush1.xpose.msra.mxu0 0.0
        %684 = vmatprep.mubr.f32.mxu0 0.0
        %685 = vmatmul.mubr.f32.gmra.mrb[0].mxu0 %v618
        %v686 = vpop.f32.mrb[0].mxu0
        %v687 = vadd.f32 0.0, %v686
        %v688 = vpop.f32.mrb[0].mxu0
        %689 = vdwg.mxu0
        %v690 = vxor.u32 %v687, 2147483648
        %v691 = vmul.f32 %v690, 1.442695
        %v692 = vpow.pop %v691
        %v693 = vadd.f32 %v692, 1.0
        %v694 = vrcp.pop %v693
        %v695 = vmul.f32 1.0, %v694
        %696 = vst.msk [vmem:[%s211] sm:$0xff] %vm368, %v695
        %697 = vrot.lane.b32.xlu0 %v286, 48
        %v698 = vpop.permute.xlu0 %697
        %v699 = vsel %vm215, %v698, 0
        %701 = vmatprep.subr.mxu0 0.0
        %702 = vmatpush1.xpose.msra.mxu0 %v217
        %703 = vmatprep.subr.mxu0 0.0
        %704 = vmatpush1.xpose.msra.mxu0 0.0
        %705 = vmatprep.subr.mxu0 0.0
        %706 = vmatpush1.xpose.msra.mxu0 0.0
        %707 = vmatprep.subr.mxu0 0.0
        %708 = vmatpush1.xpose.msra.mxu0 0.0
        %709 = vmatprep.subr.mxu0 0.0
        %710 = vmatpush1.xpose.msra.mxu0 0.0
        %711 = vmatprep.subr.mxu0 0.0
        %712 = vmatpush1.xpose.msra.mxu0 0.0
        %713 = vmatprep.subr.mxu0 0.0
        %714 = vmatpush1.xpose.msra.mxu0 0.0
        %715 = vmatprep.subr.mxu0 0.0
        %716 = vmatpush1.xpose.msra.mxu0 0.0
        %717 = vmatprep.subr.mxu0 0.0
        %718 = vmatpush1.xpose.msra.mxu0 0.0
        %719 = vmatprep.subr.mxu0 0.0
        %720 = vmatpush1.xpose.msra.mxu0 0.0
        %721 = vmatprep.subr.mxu0 0.0
        %722 = vmatpush1.xpose.msra.mxu0 0.0
        %723 = vmatprep.subr.mxu0 0.0
        %724 = vmatpush1.xpose.msra.mxu0 0.0
        %725 = vmatprep.subr.mxu0 0.0
        %726 = vmatpush1.xpose.msra.mxu0 0.0
        %727 = vmatprep.subr.mxu0 0.0
        %728 = vmatpush1.xpose.msra.mxu0 0.0
        %729 = vmatprep.subr.mxu0 0.0
        %730 = vmatpush1.xpose.msra.mxu0 0.0
        %731 = vmatprep.subr.mxu0 0.0
        %732 = vmatpush1.xpose.msra.mxu0 0.0
        %733 = vmatprep.subr.mxu0 0.0
        %734 = vmatpush1.xpose.msra.mxu0 0.0
        %735 = vmatprep.subr.mxu0 0.0
        %736 = vmatpush1.xpose.msra.mxu0 0.0
        %737 = vmatprep.subr.mxu0 0.0
        %738 = vmatpush1.xpose.msra.mxu0 0.0
        %739 = vmatprep.subr.mxu0 0.0
        %740 = vmatpush1.xpose.msra.mxu0 0.0
        %741 = vmatprep.subr.mxu0 0.0
        %742 = vmatpush1.xpose.msra.mxu0 0.0
        %743 = vmatprep.subr.mxu0 0.0
        %744 = vmatpush1.xpose.msra.mxu0 0.0
        %745 = vmatprep.subr.mxu0 0.0
        %746 = vmatpush1.xpose.msra.mxu0 0.0
        %747 = vmatprep.subr.mxu0 0.0
        %748 = vmatpush1.xpose.msra.mxu0 0.0
        %749 = vmatprep.subr.mxu0 0.0
        %750 = vmatpush1.xpose.msra.mxu0 0.0
        %751 = vmatprep.subr.mxu0 0.0
        %752 = vmatpush1.xpose.msra.mxu0 0.0
        %753 = vmatprep.subr.mxu0 0.0
        %754 = vmatpush1.xpose.msra.mxu0 0.0
        %755 = vmatprep.subr.mxu0 0.0
        %756 = vmatpush1.xpose.msra.mxu0 0.0
        %757 = vmatprep.subr.mxu0 0.0
        %758 = vmatpush1.xpose.msra.mxu0 0.0
        %759 = vmatprep.subr.mxu0 0.0
        %760 = vmatpush1.xpose.msra.mxu0 0.0
        %761 = vmatprep.subr.mxu0 0.0
        %762 = vmatpush1.xpose.msra.mxu0 0.0
        %763 = vmatprep.subr.mxu0 0.0
        %764 = vmatpush1.xpose.msra.mxu0 0.0
        %765 = vmatprep.mubr.f32.mxu0 0.0
        %766 = vmatmul.mubr.f32.gmra.mrb[0].mxu0 %v699
        %v767 = vpop.f32.mrb[0].mxu0
        %v768 = vadd.f32 0.0, %v767
        %v769 = vpop.f32.mrb[0].mxu0
        %770 = vdwg.mxu0
        %v771 = vxor.u32 %v768, 2147483648
        %v772 = vmul.f32 %v771, 1.442695
        %v773 = vpow.pop %v772
        %v774 = vadd.f32 %v773, 1.0
        %v775 = vrcp.pop %v774
        %v776 = vmul.f32 1.0, %v775
        %s777 = scalar_lea.vmem %s211, 8 [#allocation8]
        %778 = vst.msk [vmem:[%s777] sm:$0xff] %vm368, %v776
        %779 = vrot.lane.b32.xlu0 %v286, 32
        %v780 = vpop.permute.xlu0 %779
        %v781 = vsel %vm215, %v780, 0
        %783 = vmatprep.subr.mxu0 0.0
        %784 = vmatpush1.xpose.msra.mxu0 %v217
        %785 = vmatprep.subr.mxu0 0.0
        %786 = vmatpush1.xpose.msra.mxu0 0.0
        %787 = vmatprep.subr.mxu0 0.0
        %788 = vmatpush1.xpose.msra.mxu0 0.0
        %789 = vmatprep.subr.mxu0 0.0
        %790 = vmatpush1.xpose.msra.mxu0 0.0
        %791 = vmatprep.subr.mxu0 0.0
        %792 = vmatpush1.xpose.msra.mxu0 0.0
        %793 = vmatprep.subr.mxu0 0.0
        %794 = vmatpush1.xpose.msra.mxu0 0.0
        %795 = vmatprep.subr.mxu0 0.0
        %796 = vmatpush1.xpose.msra.mxu0 0.0
        %797 = vmatprep.subr.mxu0 0.0
        %798 = vmatpush1.xpose.msra.mxu0 0.0
        %799 = vmatprep.subr.mxu0 0.0
        %800 = vmatpush1.xpose.msra.mxu0 0.0
        %801 = vmatprep.subr.mxu0 0.0
        %802 = vmatpush1.xpose.msra.mxu0 0.0
        %803 = vmatprep.subr.mxu0 0.0
        %804 = vmatpush1.xpose.msra.mxu0 0.0
        %805 = vmatprep.subr.mxu0 0.0
        %806 = vmatpush1.xpose.msra.mxu0 0.0
        %807 = vmatprep.subr.mxu0 0.0
        %808 = vmatpush1.xpose.msra.mxu0 0.0
        %809 = vmatprep.subr.mxu0 0.0
        %810 = vmatpush1.xpose.msra.mxu0 0.0
        %811 = vmatprep.subr.mxu0 0.0
        %812 = vmatpush1.xpose.msra.mxu0 0.0
        %813 = vmatprep.subr.mxu0 0.0
        %814 = vmatpush1.xpose.msra.mxu0 0.0
        %815 = vmatprep.subr.mxu0 0.0
        %816 = vmatpush1.xpose.msra.mxu0 0.0
        %817 = vmatprep.subr.mxu0 0.0
        %818 = vmatpush1.xpose.msra.mxu0 0.0
        %819 = vmatprep.subr.mxu0 0.0
        %820 = vmatpush1.xpose.msra.mxu0 0.0
        %821 = vmatprep.subr.mxu0 0.0
        %822 = vmatpush1.xpose.msra.mxu0 0.0
        %823 = vmatprep.subr.mxu0 0.0
        %824 = vmatpush1.xpose.msra.mxu0 0.0
        %825 = vmatprep.subr.mxu0 0.0
        %826 = vmatpush1.xpose.msra.mxu0 0.0
        %827 = vmatprep.subr.mxu0 0.0
        %828 = vmatpush1.xpose.msra.mxu0 0.0
        %829 = vmatprep.subr.mxu0 0.0
        %830 = vmatpush1.xpose.msra.mxu0 0.0
        %831 = vmatprep.subr.mxu0 0.0
        %832 = vmatpush1.xpose.msra.mxu0 0.0
        %833 = vmatprep.subr.mxu0 0.0
        %834 = vmatpush1.xpose.msra.mxu0 0.0
        %835 = vmatprep.subr.mxu0 0.0
        %836 = vmatpush1.xpose.msra.mxu0 0.0
        %837 = vmatprep.subr.mxu0 0.0
        %838 = vmatpush1.xpose.msra.mxu0 0.0
        %839 = vmatprep.subr.mxu0 0.0
        %840 = vmatpush1.xpose.msra.mxu0 0.0
        %841 = vmatprep.subr.mxu0 0.0
        %842 = vmatpush1.xpose.msra.mxu0 0.0
        %843 = vmatprep.subr.mxu0 0.0
        %844 = vmatpush1.xpose.msra.mxu0 0.0
        %845 = vmatprep.subr.mxu0 0.0
        %846 = vmatpush1.xpose.msra.mxu0 0.0
        %847 = vmatprep.mubr.f32.mxu0 0.0
        %848 = vmatmul.mubr.f32.gmra.mrb[0].mxu0 %v781
        %v849 = vpop.f32.mrb[0].mxu0
        %v850 = vadd.f32 0.0, %v849
        %v851 = vpop.f32.mrb[0].mxu0
        %852 = vdwg.mxu0
        %v853 = vxor.u32 %v850, 2147483648
        %v854 = vmul.f32 %v853, 1.442695
        %v855 = vpow.pop %v854
        %v856 = vadd.f32 %v855, 1.0
        %v857 = vrcp.pop %v856
        %v858 = vmul.f32 1.0, %v857
        %s859 = scalar_lea.vmem %s211, 16 [#allocation8]
        %860 = vst.msk [vmem:[%s859] sm:$0xff] %vm368, %v858
        %861 = vrot.lane.b32.xlu0 %v286, 16
        %v862 = vpop.permute.xlu0 %861
        %v863 = vsel %vm215, %v862, 0
        %865 = vmatprep.subr.mxu0 0.0
        %866 = vmatpush1.xpose.msra.mxu0 %v217
        %867 = vmatprep.subr.mxu0 0.0
        %868 = vmatpush1.xpose.msra.mxu0 0.0
        %869 = vmatprep.subr.mxu0 0.0
        %870 = vmatpush1.xpose.msra.mxu0 0.0
        %871 = vmatprep.subr.mxu0 0.0
        %872 = vmatpush1.xpose.msra.mxu0 0.0
        %873 = vmatprep.subr.mxu0 0.0
        %874 = vmatpush1.xpose.msra.mxu0 0.0
        %875 = vmatprep.subr.mxu0 0.0
        %876 = vmatpush1.xpose.msra.mxu0 0.0
        %877 = vmatprep.subr.mxu0 0.0
        %878 = vmatpush1.xpose.msra.mxu0 0.0
        %879 = vmatprep.subr.mxu0 0.0
        %880 = vmatpush1.xpose.msra.mxu0 0.0
        %881 = vmatprep.subr.mxu0 0.0
        %882 = vmatpush1.xpose.msra.mxu0 0.0
        %883 = vmatprep.subr.mxu0 0.0
        %884 = vmatpush1.xpose.msra.mxu0 0.0
        %885 = vmatprep.subr.mxu0 0.0
        %886 = vmatpush1.xpose.msra.mxu0 0.0
        %887 = vmatprep.subr.mxu0 0.0
        %888 = vmatpush1.xpose.msra.mxu0 0.0
        %889 = vmatprep.subr.mxu0 0.0
        %890 = vmatpush1.xpose.msra.mxu0 0.0
        %891 = vmatprep.subr.mxu0 0.0
        %892 = vmatpush1.xpose.msra.mxu0 0.0
        %893 = vmatprep.subr.mxu0 0.0
        %894 = vmatpush1.xpose.msra.mxu0 0.0
        %895 = vmatprep.subr.mxu0 0.0
        %896 = vmatpush1.xpose.msra.mxu0 0.0
        %897 = vmatprep.subr.mxu0 0.0
        %898 = vmatpush1.xpose.msra.mxu0 0.0
        %899 = vmatprep.subr.mxu0 0.0
        %900 = vmatpush1.xpose.msra.mxu0 0.0
        %901 = vmatprep.subr.mxu0 0.0
        %902 = vmatpush1.xpose.msra.mxu0 0.0
        %903 = vmatprep.subr.mxu0 0.0
        %904 = vmatpush1.xpose.msra.mxu0 0.0
        %905 = vmatprep.subr.mxu0 0.0
        %906 = vmatpush1.xpose.msra.mxu0 0.0
        %907 = vmatprep.subr.mxu0 0.0
        %908 = vmatpush1.xpose.msra.mxu0 0.0
        %909 = vmatprep.subr.mxu0 0.0
        %910 = vmatpush1.xpose.msra.mxu0 0.0
        %911 = vmatprep.subr.mxu0 0.0
        %912 = vmatpush1.xpose.msra.mxu0 0.0
        %913 = vmatprep.subr.mxu0 0.0
        %914 = vmatpush1.xpose.msra.mxu0 0.0
        %915 = vmatprep.subr.mxu0 0.0
        %916 = vmatpush1.xpose.msra.mxu0 0.0
        %917 = vmatprep.subr.mxu0 0.0
        %918 = vmatpush1.xpose.msra.mxu0 0.0
        %919 = vmatprep.subr.mxu0 0.0
        %920 = vmatpush1.xpose.msra.mxu0 0.0
        %921 = vmatprep.subr.mxu0 0.0
        %922 = vmatpush1.xpose.msra.mxu0 0.0
        %923 = vmatprep.subr.mxu0 0.0
        %924 = vmatpush1.xpose.msra.mxu0 0.0
        %925 = vmatprep.subr.mxu0 0.0
        %926 = vmatpush1.xpose.msra.mxu0 0.0
        %927 = vmatprep.subr.mxu0 0.0
        %928 = vmatpush1.xpose.msra.mxu0 0.0
        %929 = vmatprep.mubr.f32.mxu0 0.0
        %930 = vmatmul.mubr.f32.gmra.mrb[0].mxu0 %v863
        %v931 = vpop.f32.mrb[0].mxu0
        %v932 = vadd.f32 0.0, %v931
        %v933 = vpop.f32.mrb[0].mxu0
        %934 = vdwg.mxu0
        %v935 = vxor.u32 %v932, 2147483648
        %v936 = vmul.f32 %v935, 1.442695
        %v937 = vpow.pop %v936
        %v938 = vadd.f32 %v937, 1.0
        %v939 = vrcp.pop %v938
        %v940 = vmul.f32 1.0, %v939
        %s941 = scalar_lea.vmem %s211, 24 [#allocation8]
        %942 = vst.msk [vmem:[%s941] sm:$0xff] %vm368, %v940
        %s943 = sand.u32 %s80, 1
        %s944 = scalar_lea.sflag [#allocation4], %s943
        %s945 = sand.u32 %s80, 1
        %s946 = smul.addr %s945, 32
        %s947 = scalar_lea.vmem [#allocation7], %s946
        %s948 = sand.u32 %s106, 1
        %s949 = scalar_lea.sflag [#allocation9], %s948
        %s950 = sand.u32 %s106, 1
        %s951 = smul.addr %s950, 32
        %s952 = scalar_lea.vmem [#allocation8], %s951
        // Predicated region
        $region37: #{_lambda_.1} parent=27 // pred_check
          %p953 = pneg %p90
        $region38: #{_lambda_.1} parent=27 // pred_check_branch
          %955 = sbr.rel (%p953) target = $region40
        $region39: #{_lambda_.1} parent=27 // pred_region
          %s957 = ssub.s32 512, 512
          %958 = vsyncadd %s944, %s957
          %s959 = smul.addr %s25, 4
          %s960 = smul.addr %s959, 128
          %s961 = scalar_lea.hbm %s2, %s960
          %s962 = sshll.u32 %s947, 4
          %s963 = int_to_ptr.vmem [resolvable:$true] %s962
          %968 = dma.vmem_to_hbm [thread:$0]  %s963, 512, %s961, %s944, 128, 128, 8
        $region40: #{_lambda_.1} parent=27 // pred_fallthru
          _
        // Predicated region
        $region41: #{_lambda_.1} parent=27 // pred_check
          %p969 = pneg %p116
        $region42: #{_lambda_.1} parent=27 // pred_check_branch
          %971 = sbr.rel (%p969) target = $region44
        $region43: #{_lambda_.1} parent=27 // pred_region
          %s973 = ssub.s32 512, 512
          %974 = vsyncadd %s949, %s973
          %s975 = smul.addr %s25, 4
          %s976 = smul.addr %s975, 128
          %s977 = scalar_lea.hbm %s3, %s976
          %s978 = sshll.u32 %s952, 4
          %s979 = int_to_ptr.vmem [resolvable:$true] %s978
          %984 = dma.vmem_to_hbm [thread:$0]  %s979, 512, %s977, %s949, 128, 128, 8
        $region44: #{_lambda_.1} parent=27 // pred_fallthru
          _
      $region28: #{_lambda_.1} parent=5 // pred_fallthru
        _
      %p985 = scmp.le.s32.totalorder 2, %s20
      // Predicated region
      $region45: #{_lambda_.1} parent=5 // pred_check
        %p986 = pneg %p985
      $region46: #{_lambda_.1} parent=5 // pred_check_branch
        %988 = sbr.rel (%p986) target = $region48
      $region47: #{_lambda_.1} parent=5 // pred_region
        %s989 = ssub.s32 %s20, 2
        // Predicated region
        $region49: #{_lambda_.1} parent=47 // pred_check
          %p990 = pneg %p96
        $region50: #{_lambda_.1} parent=47 // pred_check_branch
          %992 = sbr.rel (%p990) target = $region52
        $region51: #{_lambda_.1} parent=47 // pred_region
          %s993 = sand.u32 %s81, 1
          %s994 = scalar_lea.sflag [#allocation4], %s993
          %s995 = sand.u32 %s81, 1
          %s996 = smul.addr %s995, 32
          %s997 = scalar_lea.vmem [#allocation7], %s996
          %998 = dma.done %s994, 512
        $region52: #{_lambda_.1} parent=47 // pred_fallthru
          _
        // Predicated region
        $region53: #{_lambda_.1} parent=47 // pred_check
          %p999 = pneg %p122
        $region54: #{_lambda_.1} parent=47 // pred_check_branch
          %1001 = sbr.rel (%p999) target = $region56
        $region55: #{_lambda_.1} parent=47 // pred_region
          %s1002 = sand.u32 %s107, 1
          %s1003 = scalar_lea.sflag [#allocation9], %s1002
          %s1004 = sand.u32 %s107, 1
          %s1005 = smul.addr %s1004, 32
          %s1006 = scalar_lea.vmem [#allocation8], %s1005
          %1007 = dma.done %s1003, 512
        $region56: #{_lambda_.1} parent=47 // pred_fallthru
          _
      $region48: #{_lambda_.1} parent=5 // pred_fallthru
        _
    $region6: #{_lambda_.1} parent=1 // loop_footer
      %s24 = sadd.s32 1, %s20
    $region7: #{_lambda_.1} parent=1 // loop_footer_branch
      %19 = sbr.rel target = $region3
    $region8: #{_lambda_.1} parent=1 // loop_exit
      _
    %1008 = vsyncpa [#allocation3], 1
    %s1009 = scalar_lea.sflag [#allocation3], 1
    %1010 = vsyncpa %s1009, 1
    %1011 = vsyncpa [#allocation6], 1
    %1012 = vsyncpa [#allocation4], 1
    %s1013 = scalar_lea.sflag [#allocation4], 1
    %1014 = vsyncpa %s1013, 1
    %1015 = vsyncpa [#allocation9], 1
    %s1016 = scalar_lea.sflag [#allocation9], 1
    %1017 = vsyncpa %s1016, 1

</llo_original>
